<compile_context>
chip_gen: v7x
topology: tpu7x:2x2x1
jax: 0.10.0
libtpu: 0.0.40
codegen_flags: <defaults>
</compile_context>

<pallas_src>
import jax
import jax.numpy as jnp
from jax.experimental import pallas as pl
from jax.experimental.pallas import tpu as pltpu

LANES = 128
SUBLANES = 8


def _round_up(x, m):
    return ((x + m - 1) // m) * m


def _cdiv(a, b):
    return (a + b - 1) // b


def _make_loss_kernel(pos_cost, orient_cost, velocity_cost):
    pos_cost = float(pos_cost)
    orient_cost = float(orient_cost)
    velocity_cost = float(velocity_cost)

    def kernel(end_ref, goal_ref, out_ref, acc_ref):
        step = pl.program_id(1)

        @pl.when(step == 0)
        def _():
            acc_ref[...] = jnp.zeros_like(acc_ref)

        # Steady state: abs-diff + fold (TB, 128) -> (8, 128).  The reshape
        # only splits the leading dim (no (8,128) tile boundary crossed), so
        # this is pure VPU vreg adds -- no XLU on the critical path.
        tb = end_ref.shape[0]
        diff = jnp.abs(end_ref[...] - goal_ref[...])                  # (TB, 128)
        acc_ref[...] += jnp.sum(
            diff.reshape(tb // SUBLANES, SUBLANES, LANES), axis=0)    # (8, 128)

        @pl.when(step == pl.num_programs(1) - 1)
        def _():
            # Epilogue (once per shard): cross-sublane reduce, apply the
            # per-state-dim weights (weight depends only on lane % 4 since
            # 128 % 4 == 0), cross-lane reduce, scalar store to SMEM.
            per_lane = jnp.sum(acc_ref[...], axis=0, keepdims=True)   # (1, 128)
            lane_mod = jax.lax.broadcasted_iota(jnp.int32, (1, LANES), 1) % 4
            w = jnp.where(
                lane_mod < 2,
                jnp.float32(pos_cost),
                jnp.where(lane_mod == 2,
                          jnp.float32(orient_cost),
                          jnp.float32(velocity_cost)),
            )
            out_ref[0, 0] = jnp.sum(per_lane * w)

    return kernel


def weighted_abs_loss(end_position, goal_position,
                      pos_cost=10.0, orient_cost=1.0, velocity_cost=0.0,
                      block_rows=512, num_shards=None):
    """Pallas TPU version of Loss.forward. Returns a float32 scalar.

    block_rows: rows of 128 lanes per grid step (512 keeps the double-buffered
    VMEM footprint ~1 MiB, safe for v5e/v6e/v7x default scoped VMEM).
    """
    assert end_position.shape == goal_position.shape
    assert end_position.ndim == 2 and end_position.shape[1] >= 4

    # Only the first 4 state columns [x, y, orientation, velocity] contribute
    # (extra columns are ignored by the reference loss).
    end = end_position[:, :4].astype(jnp.float32).reshape(-1)     # (4*B,)
    goal = goal_position[:, :4].astype(jnp.float32).reshape(-1)

    n = end.shape[0]
    rows = max(_cdiv(n, LANES), 1)                  # rows of 128 lanes

    # Tile size: multiple of 8 sublanes, capped by block_rows.
    tb = _round_up(min(_round_up(block_rows, SUBLANES),
                       _round_up(rows, SUBLANES)), SUBLANES)
    steps_total = _cdiv(rows, tb)

    # Leading "parallel" shard axis: lets v7x split across its 2 TensorCores;
    # on single-core chips it is just an extra (cheap) sequential shard.
    if num_shards is None:
        num_shards = 2 if steps_total >= 2 else 1
    num_shards = max(1, min(num_shards, steps_total))
    steps_per_shard = _cdiv(steps_total, num_shards)

    rows_padded = num_shards * steps_per_shard * tb
    pad = rows_padded * LANES - n
    end = jnp.pad(end, (0, pad)).reshape(rows_padded, LANES)
    goal = jnp.pad(goal, (0, pad)).reshape(rows_padded, LANES)

    kernel = _make_loss_kernel(pos_cost, orient_cost, velocity_cost)

    def row_map(s, i):
        return (s * steps_per_shard + i, 0)

    partials = pl.pallas_call(
        kernel,
        out_shape=jax.ShapeDtypeStruct((num_shards, 1), jnp.float32),
        grid_spec=pltpu.PrefetchScalarGridSpec(
            num_scalar_prefetch=0,
            grid=(num_shards, steps_per_shard),
            in_specs=[
                pl.BlockSpec((tb, LANES), row_map),
                pl.BlockSpec((tb, LANES), row_map),
            ],
            out_specs=pl.BlockSpec((1, 1), lambda s, i: (s, 0),
                                   memory_space=pltpu.SMEM),
            scratch_shapes=[pltpu.VMEM((SUBLANES, LANES), jnp.float32)],
        ),
        compiler_params=pltpu.CompilerParams(
            dimension_semantics=("parallel", "arbitrary"),
        ),
    )(end, goal)

    # Combine the per-shard partial sums (trivial host-side XLA reduce).
    return jnp.sum(partials)


def _reference_loss(end_position, goal_position,
                    pos_cost=10.0, orient_cost=1.0, velocity_cost=0.0):
    return (jnp.sum(jnp.abs(end_position[:, :2] - goal_position[:, :2])) * pos_cost
            + jnp.sum(jnp.abs(end_position[:, 2] - goal_position[:, 2])) * orient_cost
            + jnp.sum(jnp.abs(end_position[:, 3] - goal_position[:, 3])) * velocity_cost)


if __name__ == "__main__":
    key = jax.random.PRNGKey(0)
    k1, k2, k3, k4, k5, k6 = jax.random.split(key, 6)

    # Case 1: the module's natural tiny shape — batch of 8 states [x,y,theta,v].
    e1 = jax.random.normal(k1, (8, 4), dtype=jnp.float32)
    g1 = jax.random.normal(k2, (8, 4), dtype=jnp.float32)
    l1 = jax.block_until_ready(weighted_abs_loss(e1, g1, 10.0, 1.0, 0.0))
    r1 = _reference_loss(e1, g1, 10.0, 1.0, 0.0)
    assert jnp.allclose(l1, r1, rtol=1e-5, atol=1e-5), (l1, r1)

    # Case 2: padding path (B*4 not a multiple of 128) + nonzero velocity cost.
    e2 = jax.random.normal(k3, (10, 4), dtype=jnp.float32)
    g2 = jax.random.normal(k4, (10, 4), dtype=jnp.float32)
    l2 = jax.block_until_ready(weighted_abs_loss(e2, g2, 10.0, 1.0, 0.5))
    r2 = _reference_loss(e2, g2, 10.0, 1.0, 0.5)
    assert jnp.allclose(l2, r2, rtol=1e-5, atol=1e-5), (l2, r2)

    # Case 3: force the multi-step, 2-shard pipelined path with a small tile.
    e3 = jax.random.normal(k5, (1024, 4), dtype=jnp.float32)
    g3 = jax.random.normal(k6, (1024, 4), dtype=jnp.float32)
    l3 = jax.block_until_ready(
        weighted_abs_loss(e3, g3, 10.0, 1.0, 0.0, block_rows=8))
    r3 = _reference_loss(e3, g3, 10.0, 1.0, 0.0)
    assert jnp.allclose(l3, r3, rtol=1e-4, atol=1e-4), (l3, r3)

    # TODO(synk): for the tiny demo batch this op is best fused into the
    # surrounding controller/optimizer kernel; standalone it only pays off
    # for large batches.

    print("KERNEL_OK")
</pallas_src>

<mosaic_0001>
module attributes {stable_mosaic.version = 11 : i64} {
  func.func @kernel(%arg0: i32, %arg1: i32, %arg2: memref<8x128xf32, #tpu.memory_space<vmem>>, %arg3: memref<8x128xf32, #tpu.memory_space<vmem>>, %arg4: memref<1x1xf32, #tpu.memory_space<smem>>, %arg5: memref<8x128xf32, #tpu.memory_space<vmem>>) attributes {dimension_semantics = [#tpu.dimension_semantics<parallel>, #tpu.dimension_semantics<arbitrary>], iteration_bounds = array<i64: 1, 1>, scalar_prefetch = 0 : i64, scratch_operands = 1 : i64, tpu.core_type = #tpu.core_type<tc>, window_params = [{transform_indices = @transform_0, window_bounds = array<i64: 8, 128>}, {transform_indices = @transform_1, window_bounds = array<i64: 8, 128>}, {transform_indices = @transform_2, window_bounds = array<i64: 1, 1>}]} {
    %c0_i32 = arith.constant 0 : i32
    %0 = arith.cmpi eq, %arg1, %c0_i32 : i32
    %1 = arith.extui %0 : i1 to i32
    %c0_i32_0 = arith.constant 0 : i32
    %2 = arith.cmpi ne, %1, %c0_i32_0 : i32
    scf.if %2 {
      %cst_10 = arith.constant 0.000000e+00 : f32
      %15 = vector.broadcast %cst_10 : f32 to vector<8x128xf32>
      %c0_11 = arith.constant 0 : index
      %c0_12 = arith.constant 0 : index
      %16 = vector.load %arg5[%c0_11, %c0_12] : memref<8x128xf32, #tpu.memory_space<vmem>>, vector<8x128xf32>
      tpu.vector_store %arg5[%c0_11, %c0_12], %15 {strides = array<i32>} : memref<8x128xf32, #tpu.memory_space<vmem>>, vector<8x128xf32>,
    } else {
    }
    %c0 = arith.constant 0 : index
    %c0_1 = arith.constant 0 : index
    %3 = vector.load %arg2[%c0, %c0_1] : memref<8x128xf32, #tpu.memory_space<vmem>>, vector<8x128xf32>
    %c0_2 = arith.constant 0 : index
    %c0_3 = arith.constant 0 : index
    %4 = vector.load %arg3[%c0_2, %c0_3] : memref<8x128xf32, #tpu.memory_space<vmem>>, vector<8x128xf32>
    %5 = arith.subf %3, %4 : vector<8x128xf32>
    %6 = math.absf %5 : vector<8x128xf32>
    %c0_4 = arith.constant 0 : index
    %c0_5 = arith.constant 0 : index
    %7 = vector.load %arg5[%c0_4, %c0_5] : memref<8x128xf32, #tpu.memory_space<vmem>>, vector<8x128xf32>
    %8 = vector.shape_cast %6 : vector<8x128xf32> to vector<1x8x128xf32>
    %cst = arith.constant dense<0.000000e+00> : vector<8x128xf32>
    %9 = vector.multi_reduction <add>, %8, %cst [0] : vector<1x8x128xf32> to vector<8x128xf32>
    %10 = arith.addf %7, %9 : vector<8x128xf32>
    %c0_6 = arith.constant 0 : index
    %c0_7 = arith.constant 0 : index
    %11 = vector.load %arg5[%c0_6, %c0_7] : memref<8x128xf32, #tpu.memory_space<vmem>>, vector<8x128xf32>
    tpu.vector_store %arg5[%c0_6, %c0_7], %10 {strides = array<i32>} : memref<8x128xf32, #tpu.memory_space<vmem>>, vector<8x128xf32>,
    %c0_i32_8 = arith.constant 0 : i32
    %12 = arith.cmpi eq, %arg1, %c0_i32_8 : i32
    %13 = arith.extui %12 : i1 to i32
    %c0_i32_9 = arith.constant 0 : i32
    %14 = arith.cmpi ne, %13, %c0_i32_9 : i32
    scf.if %14 {
      %c0_10 = arith.constant 0 : index
      %c0_11 = arith.constant 0 : index
      %15 = vector.load %arg5[%c0_10, %c0_11] : memref<8x128xf32, #tpu.memory_space<vmem>>, vector<8x128xf32>
      %cst_12 = arith.constant dense<0.000000e+00> : vector<128xf32>
      %16 = vector.multi_reduction <add>, %15, %cst_12 [0] : vector<8x128xf32> to vector<128xf32>
      %17 = vector.shape_cast %16 : vector<128xf32> to vector<1x128xf32>
      %18 = tpu.iota {dimensions = array<i32: 1>} : vector<1x128xi32>
      %c4_i32 = arith.constant 4 : i32
      %c0_i32_13 = arith.constant 0 : i32
      %19 = arith.cmpi eq, %c4_i32, %c0_i32_13 : i32
      %c1_i32 = arith.constant 1 : i32
      %20 = arith.select %19, %c1_i32, %c4_i32 : i32
      %21 = vector.broadcast %20 : i32 to vector<1x128xi32>
      %22 = arith.remsi %18, %21 : vector<1x128xi32>
      %c0_i32_14 = arith.constant 0 : i32
      %23 = vector.broadcast %c0_i32_14 : i32 to vector<1x128xi32>
      %24 = arith.cmpi ne, %22, %23 : vector<1x128xi32>
      %c0_i32_15 = arith.constant 0 : i32
      %25 = vector.broadcast %c0_i32_15 : i32 to vector<1x128xi32>
      %26 = arith.cmpi slt, %22, %25 : vector<1x128xi32>
      %c0_i32_16 = arith.constant 0 : i32
      %27 = arith.cmpi slt, %20, %c0_i32_16 : i32
      %28 = vector.broadcast %27 : i1 to vector<1x128xi1>
      %29 = vector.broadcast %28 : vector<1x128xi1> to vector<1x128xi1>
      %30 = arith.xori %26, %29 : vector<1x128xi1>
      %31 = arith.andi %30, %24 : vector<1x128xi1>
      %32 = vector.broadcast %20 : i32 to vector<1x128xi32>
      %33 = arith.addi %22, %32 : vector<1x128xi32>
      %34 = arith.select %31, %33, %22 : vector<1x128xi1>, vector<1x128xi32>
      %c2_i32 = arith.constant 2 : i32
      %35 = vector.broadcast %c2_i32 : i32 to vector<1x128xi32>
      %36 = arith.cmpi slt, %34, %35 : vector<1x128xi32>
      %c2_i32_17 = arith.constant 2 : i32
      %37 = vector.broadcast %c2_i32_17 : i32 to vector<1x128xi32>
      %38 = arith.cmpi eq, %34, %37 : vector<1x128xi32>
      %cst_18 = arith.constant 1.000000e+00 : f32
      %cst_19 = arith.constant 0.000000e+00 : f32
      %39 = vector.broadcast %cst_18 : f32 to vector<1x128xf32>
      %40 = vector.broadcast %cst_19 : f32 to vector<1x128xf32>
      %41 = arith.select %38, %39, %40 : vector<1x128xi1>, vector<1x128xf32>
      %cst_20 = arith.constant 1.000000e+01 : f32
      %42 = vector.broadcast %cst_20 : f32 to vector<1x128xf32>
      %43 = arith.select %36, %42, %41 : vector<1x128xi1>, vector<1x128xf32>
      %44 = arith.mulf %17, %43 : vector<1x128xf32>
      %45 = vector.shape_cast %44 : vector<1x128xf32> to vector<1x1x128xf32>
      %cst_21 = arith.constant dense<0.000000e+00> : vector<1xf32>
      %46 = vector.multi_reduction <add>, %45, %cst_21 [1, 2] : vector<1x1x128xf32> to vector<1xf32>
      %47 = vector.shape_cast %46 : vector<1xf32> to vector<1x1x1xf32>
      %48 = vector.extract %47[0, 0, 0] : f32 from vector<1x1x1xf32>
      %c0_22 = arith.constant 0 : index
      %c0_23 = arith.constant 0 : index
      %49 = memref.load %arg4[%c0_22, %c0_23] : memref<1x1xf32, #tpu.memory_space<smem>>
      memref.store %48, %arg4[%c0_22, %c0_23] : memref<1x1xf32, #tpu.memory_space<smem>>
    } else {
    }
    return
  }
  func.func @transform_0(%arg0: i32, %arg1: i32) -> (i32, i32) {
    %c1_i32 = arith.constant 1 : i32
    %0 = arith.muli %arg0, %c1_i32 : i32
    %1 = arith.addi %0, %arg1 : i32
    %c0_i32 = arith.constant 0 : i32
    %c0_i32_0 = arith.constant 0 : i32
    return %1, %c0_i32 : i32, i32
  }
  func.func @transform_1(%arg0: i32, %arg1: i32) -> (i32, i32) {
    %c1_i32 = arith.constant 1 : i32
    %0 = arith.muli %arg0, %c1_i32 : i32
    %1 = arith.addi %0, %arg1 : i32
    %c0_i32 = arith.constant 0 : i32
    %c0_i32_0 = arith.constant 0 : i32
    return %1, %c0_i32 : i32, i32
  }
  func.func @transform_2(%arg0: i32, %arg1: i32) -> (i32, i32) {
    %c0_i32 = arith.constant 0 : i32
    %c0_i32_0 = arith.constant 0 : i32
    return %arg0, %c0_i32 : i32, i32
  }
}

</mosaic_0001>

<llo_original>
// kernel: tpu_custom_call.1
$region0: #{tpu_custom_call.1}
  #allocation0 [shape = 'u32[]', space=smem, size = 0x4, offset = 0x4, fixed_abs, tag = 'smem constant byte address 0x4 - core index']
  #allocation1 [shape = 'u32[144,128]{1,0:T(1,128)}', space=vmem, size = 0x12000, scoped, tag = 'internal scratch']
  #allocation2 [shape = 'f32[8,128]{1,0:T(8,128)}', space=vmem, size = 0x1000, scoped, tag = 'scratch operand']
  %s0 = inlined_call_operand.hbm [shape: f32[8,128], index: 0, kind: input, shape index: {}]
  %s1 = inlined_call_operand.hbm [shape: f32[8,128], index: 1, kind: input, shape index: {}]
  %s2 = inlined_call_operand.hbm [shape: f32[1,1], index: 2, kind: output, shape index: {}]
  %s3 = sld [smem:[#allocation0]]
  $region34: #{tpu_custom_call.1} parent=0
    _
  %s5 = ssub.s32 1, %s3
  %s6 = scalar_select 0, %s5, %s3
  $region1: #{tpu_custom_call.1} parent=0
    #allocation3 [shape = 'u8[4096]{0}', space=vmem, size = 0x1000, scoped, tag = 'input window, operand 0, single buffered']
    #allocation4 [shape = 's32[1]{0}', space=sflag, size = 0x4, scoped, tag = 'scoped memory for tpu_custom_call.1']
    #allocation5 [shape = 's32[1]{0}', space=sflag, size = 0x4, scoped, tag = 'scoped memory for tpu_custom_call.1']
    #allocation6 [shape = 'u8[4096]{0}', space=vmem, size = 0x1000, scoped, tag = 'input window, operand 1, single buffered']
    #allocation7 [shape = 's32[1]{0}', space=sflag, size = 0x4, scoped, tag = 'scoped memory for tpu_custom_call.1']
    #allocation8 [shape = 'u8[512]{0}', space=smem, size = 0x200, scoped, tag = 'output window, operand 0, single buffered']
    %7 = vsyncpa [#allocation4], 0
    %8 = vsyncpa [#allocation7], 0
    %9 = vsyncpa [#allocation5], 0
    // Predicated region
    $region2: #{tpu_custom_call.1} parent=1 // pred_check
      _
    $region3: #{tpu_custom_call.1} parent=1 // pred_check_branch
      %11 = sbr.rel (0) target = $region5
    $region4: #{tpu_custom_call.1} parent=1 // pred_region
      %s12 = sadd.s32 0, 0
      %s14 = ssub.s32 128, 128
      %15 = vsyncadd [#allocation4], %s14
      %s16 = smul.addr %s12, 128
      %s17 = scalar_lea.hbm %s0, %s16
      %s19 = sshll.u32 [#allocation3], 4
      %s20 = int_to_ptr.vmem [resolvable:$true] %s19
      %22 = dma.hbm_to_vmem [thread:$0]  %s17, 128, %s20, [#allocation4]
    $region5: #{tpu_custom_call.1} parent=1 // pred_fallthru
      _
    // Predicated region
    $region6: #{tpu_custom_call.1} parent=1 // pred_check
      _
    $region7: #{tpu_custom_call.1} parent=1 // pred_check_branch
      %24 = sbr.rel (0) target = $region9
    $region8: #{tpu_custom_call.1} parent=1 // pred_region
      %s25 = sadd.s32 0, 0
      %s27 = ssub.s32 128, 128
      %28 = vsyncadd [#allocation7], %s27
      %s29 = smul.addr %s25, 128
      %s30 = scalar_lea.hbm %s1, %s29
      %s32 = sshll.u32 [#allocation6], 4
      %s33 = int_to_ptr.vmem [resolvable:$true] %s32
      %35 = dma.hbm_to_vmem [thread:$0]  %s30, 128, %s33, [#allocation7]
    $region9: #{tpu_custom_call.1} parent=1 // pred_fallthru
      _
    // Predicated region
    $region10: #{tpu_custom_call.1} parent=1 // pred_check
      _
    $region11: #{tpu_custom_call.1} parent=1 // pred_check_branch
      %37 = sbr.rel (0) target = $region13
    $region12: #{tpu_custom_call.1} parent=1 // pred_region
      %38 = dma.done [#allocation4], 128
    $region13: #{tpu_custom_call.1} parent=1 // pred_fallthru
      _
    // Predicated region
    $region14: #{tpu_custom_call.1} parent=1 // pred_check
      _
    $region15: #{tpu_custom_call.1} parent=1 // pred_check_branch
      %40 = sbr.rel (0) target = $region17
    $region16: #{tpu_custom_call.1} parent=1 // pred_region
      %41 = dma.done [#allocation7], 128
    $region17: #{tpu_custom_call.1} parent=1 // pred_fallthru
      _
    %s42 = sadd.s32 0, 0
    %s43 = sadd.s32 0, 0
    %p44 = scmp.eq.s32.totalorder 0, 0
    // Predicated region
    $region18: #{tpu_custom_call.1} parent=1 // pred_check
      %p45 = pneg %p44
    $region19: #{tpu_custom_call.1} parent=1 // pred_check_branch
      %47 = sbr.rel (%p45) target = $region21
    $region20: #{tpu_custom_call.1} parent=1 // pred_region
      %48 = vst [vmem:[#allocation2] sm:$0xff] 0.0
    $region21: #{tpu_custom_call.1} parent=1 // pred_fallthru
      _
    %v49 = vld [vmem:[#allocation3] sm:$0xff]
    %v50 = vld [vmem:[#allocation6] sm:$0xff]
    %v51 = vsub.f32 %v49, %v50
    %v52 = vand.u32 2147483647, %v51
    %v53 = vld [vmem:[#allocation2] sm:$0xff]
    %v54 = vadd.f32 %v52, 0.0
    %v55 = vadd.f32 %v53, %v54
    %56 = vst [vmem:[#allocation2] sm:$0xff] %v55
    // Predicated region
    $region22: #{tpu_custom_call.1} parent=1 // pred_check
      %p57 = pneg %p44
    $region23: #{tpu_custom_call.1} parent=1 // pred_check_branch
      %59 = sbr.rel (%p57) target = $region25
    $region24: #{tpu_custom_call.1} parent=1 // pred_region
      %v60 = vld [vmem:[#allocation2] sm:$0xff]
      %v61 = vrot.slane %v60, 4
      %v62 = vadd.f32 %v60, %v61
      %v63 = vrot.slane %v62, 2
      %v64 = vadd.f32 %v62, %v63
      %v65 = vrot.slane %v64, 1
      %v66 = vadd.f32 %v64, %v65
      %v67 = vlaneseq
      %v68 = vand.u32 %v67, 127
      %vm69 = vcmp.lt.s32.totalorder %v68, 0
      %v70 = vsub.s32 0, %v68
      %v71 = vsel %vm69, %v70, %v68
      %v72 = vshrl.u32 %v71, 2
      %v73 = vand.u32 %v71, 3
      %v74 = vsub.s32 0, %v73
      %v75 = vsel %vm69, %v74, %v73
      %vm76 = vcmp.ne.s32.totalorder %v75, 0
      %vm77 = vcmp.lt.s32.totalorder %v75, 0
      %vm78 = vmand %vm77, %vm76
      %v79 = vadd.s32 %v75, 4
      %v80 = vsel %vm78, %v79, %v75
      %vm81 = vcmp.lt.s32.totalorder %v80, 2
      %vm82 = vcmp.eq.s32.totalorder %v80, 2
      %v83 = vsel %vm82, 1.0, 0.0
      %v84 = vsel %vm81, 10.0, %v83
      %v85 = vmul.f32 %v66, %v84
      %vm86 = vcmask 1040384
      %v87 = vsel %vm86, %v85, 0.0
      %88 = vadd.xlane.f32.xlu0 %v87
      %v89 = vpop.xlane.xlu0 %88
      %v90 = vrot.slane %v89, 4
      %v91 = vadd.f32 %v89, %v90
      %v92 = vrot.slane %v91, 2
      %v93 = vadd.f32 %v91, %v92
      %v94 = vrot.slane %v93, 1
      %v95 = vadd.f32 %v93, %v94
      %s96 = vtos %v95
      %s97 = scalar_lea.smem [#allocation8], 0
      %98 = sst [smem:[%s97]] %s96
    $region25: #{tpu_custom_call.1} parent=1 // pred_fallthru
      _
    // Predicated region
    $region26: #{tpu_custom_call.1} parent=1 // pred_check
      _
    $region27: #{tpu_custom_call.1} parent=1 // pred_check_branch
      %100 = sbr.rel (0) target = $region29
    $region28: #{tpu_custom_call.1} parent=1 // pred_region
      %s102 = ssub.s32 16, 16
      %103 = vsyncadd [#allocation5], %s102
      %106 = dma.smem_to_hbm [#allocation8], 16, %s2, [#allocation5]
    $region29: #{tpu_custom_call.1} parent=1 // pred_fallthru
      _
    // Predicated region
    $region30: #{tpu_custom_call.1} parent=1 // pred_check
      _
    $region31: #{tpu_custom_call.1} parent=1 // pred_check_branch
      %108 = sbr.rel (0) target = $region33
    $region32: #{tpu_custom_call.1} parent=1 // pred_region
      %109 = dma.done [#allocation5], 16
    $region33: #{tpu_custom_call.1} parent=1 // pred_fallthru
      _
    %110 = sfence
    %111 = vsyncpa [#allocation4], 1
    %112 = vsyncpa [#allocation7], 1
    %113 = vsyncpa [#allocation5], 1

</llo_original>
